<compile_context>
chip_gen: v6e
topology: v6e:2x2x1
jax: 0.10.0
libtpu: 0.0.40
codegen_flags: <defaults>
</compile_context>

<pallas_src>
import functools

import jax
import jax.numpy as jnp
from jax import lax
from jax.experimental import pallas as pl
from jax.experimental.pallas import tpu as pltpu

NEG_SLOPE = 0.01  # F.leaky_relu default
TB_MAX = 4096     # batch-tile cap; live VMEM at 4096 is only a few MB


def _use_bf16_epilogue():
    """bf16 VALU exists on v6e / v7x; keep f32 elementwise elsewhere (e.g. v5e)."""
    try:
        kind = jax.devices()[0].device_kind.lower()
    except Exception:
        return False
    return any(tag in kind for tag in ("v6", "v7", "tpu7"))


def regression_kernel(x_ref,
                      w1_ref, b1_ref,
                      w2_ref, b2_ref,
                      w3_ref, b3_ref,
                      w4_ref, b4_ref,
                      w5_ref, b5_ref,
                      o_ref, *, bf16_epilogue):
    def epilogue(acc_f32, b_ref):
        # bias add + leaky relu; returns bf16 (next layer's MXU operand).
        if bf16_epilogue:
            h = acc_f32.astype(jnp.bfloat16) + b_ref[...].astype(jnp.bfloat16)
            return jnp.maximum(h, NEG_SLOPE * h)              # bf16 VALU, packed vregs
        h = acc_f32 + b_ref[...]
        return jnp.maximum(h, NEG_SLOPE * h).astype(jnp.bfloat16)

    # Layer 1: contract the 8 input features of the batch-major f32 tile directly:
    #   W1 (128, 8) . x (tb, 8)^T  ->  feature-major (128, tb), batch on lanes.
    # f32 operands here: K=8 is trivial MXU work and avoids a half-packed bf16 x tile.
    h = lax.dot_general(w1_ref[...], x_ref[...],
                        dimension_numbers=(((1,), (1,)), ((), ())),
                        preferred_element_type=jnp.float32)   # (128, tb) f32
    h = epilogue(h, b1_ref)                                   # bf16 (128, tb)

    h = jnp.dot(w2_ref[...], h, preferred_element_type=jnp.float32)
    h = epilogue(h, b2_ref)                                   # (128, tb)

    h = jnp.dot(w3_ref[...], h, preferred_element_type=jnp.float32)
    h = epilogue(h, b3_ref)                                   # (128, tb)

    h = jnp.dot(w4_ref[...], h, preferred_element_type=jnp.float32)
    h = epilogue(h, b4_ref)                                   # (64, tb)

    # Final Linear(64,1): broadcast-mul + sublane reduction on VPU/XLU instead of
    # an almost-empty M=1 MXU pass.  w5 is stored as a (64, 1) f32 column.
    prod = w5_ref[...] * h.astype(jnp.float32)                # (64, tb) f32
    out = jnp.sum(prod, axis=0, keepdims=True) + b5_ref[...]  # (1, tb)
    o_ref[...] = out.astype(o_ref.dtype)                      # lane-dense store


def prepare_params(params):
    """One-time (outside the forward) dtype/layout prep of PyTorch-order params.

    w{1..4}: (out, in); w1 kept f32 (layer-1 f32 dot), w2..w4 bf16 (MXU dtype).
    b{1..4}: (out, 1) f32 for lane broadcast.  w5 -> (64, 1) f32 column, b5 -> (1, 1).
    """
    p = {}
    p["w1"] = jnp.asarray(params["w1"], jnp.float32)
    for i in range(2, 5):
        p[f"w{i}"] = jnp.asarray(params[f"w{i}"], jnp.bfloat16)
    for i in range(1, 5):
        p[f"b{i}"] = jnp.asarray(params[f"b{i}"], jnp.float32).reshape(-1, 1)
    p["w5"] = jnp.asarray(params["w5"], jnp.float32).reshape(-1, 1)
    p["b5"] = jnp.asarray(params["b5"], jnp.float32).reshape(1, 1)
    return p


def _choose_tile(B):
    if B <= 256:
        return B                 # single grid step; pipelining/core-split not worth it
    tb = -(-B // 2)              # aim for >= 2 steps (both TCs on megacore / v7x)
    tb = ((tb + 127) // 128) * 128
    return min(tb, TB_MAX)


def regression_forward(x, prepped, *, tb=None, bf16_epilogue=None):
    """x: (B, 8) float32, batch-major.  prepped: output of prepare_params()."""
    B, in_dim = x.shape
    assert in_dim == 8
    if bf16_epilogue is None:
        bf16_epilogue = _use_bf16_epilogue()
    if tb is None:
        tb = _choose_tile(B)

    # Tail handling: pad the batch up to a multiple of tb, slice the result back.
    grid_b = -(-B // tb)
    Bp = grid_b * tb
    if Bp != B:
        x = jnp.pad(x, ((0, Bp - B), (0, 0)))

    def full(arr):
        nd = arr.ndim
        # Constant-index full-array block: stays resident in VMEM across steps.
        return pl.BlockSpec(arr.shape, lambda i, _nd=nd: (0,) * _nd)

    ws = [prepped[f"w{i}"] for i in range(1, 6)]
    bs = [prepped[f"b{i}"] for i in range(1, 6)]

    kernel = functools.partial(regression_kernel, bf16_epilogue=bf16_epilogue)

    out_t = pl.pallas_call(
        kernel,
        out_shape=jax.ShapeDtypeStruct((1, Bp), jnp.float32),
        grid_spec=pltpu.PrefetchScalarGridSpec(
            num_scalar_prefetch=0,
            grid=(grid_b,),
            in_specs=[
                pl.BlockSpec((tb, 8), lambda i: (i, 0)),   # batch-major f32 x tile
                full(ws[0]), full(bs[0]),
                full(ws[1]), full(bs[1]),
                full(ws[2]), full(bs[2]),
                full(ws[3]), full(bs[3]),
                full(ws[4]), full(bs[4]),
            ],
            out_specs=pl.BlockSpec((1, tb), lambda i: (0, i)),
        ),
        compiler_params=pltpu.CompilerParams(
            dimension_semantics=("parallel",)),            # shards steps across TCs
    )(x, ws[0], bs[0], ws[1], bs[1], ws[2], bs[2], ws[3], bs[3], ws[4], bs[4])

    # (1, B) -> (B, 1): free reshape (one dim is 1), matches PyTorch output shape.
    return out_t[:, :B].reshape(B, 1)


def init_params(key):
    """Deterministic init matching nn.Linear defaults (uniform ±1/sqrt(fan_in))."""
    dims = [(8, 128), (128, 128), (128, 128), (128, 64), (64, 1)]
    params = {}
    keys = jax.random.split(key, 2 * len(dims))
    for idx, (fin, fout) in enumerate(dims):
        bound = 1.0 / jnp.sqrt(fin)
        params[f"w{idx + 1}"] = jax.random.uniform(
            keys[2 * idx], (fout, fin), jnp.float32, -bound, bound)
        params[f"b{idx + 1}"] = jax.random.uniform(
            keys[2 * idx + 1], (fout,), jnp.float32, -bound, bound)
    return params


def reference_forward(x, params):
    """Pure-JAX f32 reference in standard (B, F) layout."""
    h = x
    for i in range(1, 5):
        h = h @ params[f"w{i}"].T + params[f"b{i}"]
        h = jnp.where(h > 0, h, NEG_SLOPE * h)
    return h @ params["w5"].T + params["b5"]


if __name__ == "__main__":
    key = jax.random.PRNGKey(0)
    pkey, k1, k2 = jax.random.split(key, 3)
    params = init_params(pkey)
    prepped = prepare_params(params)          # one-time cast/layout, NOT per call
    bf16_ep = _use_bf16_epilogue()

    # Small batch: single grid step (tb = B = 16).
    B1 = 16
    x1 = jax.random.normal(k1, (B1, 8), jnp.float32)
    out1 = jax.block_until_ready(regression_forward(x1, prepped, bf16_epilogue=bf16_ep))
    ref1 = reference_forward(x1, params)
    assert out1.shape == (B1, 1)
    # bf16 MXU operands / bf16 inter-layer activations -> relaxed tolerance.
    assert jnp.allclose(out1, ref1, atol=2e-2, rtol=2e-2), "mismatch vs reference (B=16)"

    # Larger ragged batch: 2-step grid (tb=384), padded tail, lane-dense stores.
    B2 = 640
    x2 = jax.random.normal(k2, (B2, 8), jnp.float32)
    out2 = jax.block_until_ready(regression_forward(x2, prepped, bf16_epilogue=bf16_ep))
    ref2 = reference_forward(x2, params)
    assert out2.shape == (B2, 1)
    assert jnp.allclose(out2, ref2, atol=2e-2, rtol=2e-2), "mismatch vs reference (B=640)"

    print("KERNEL_OK")
</pallas_src>

<mosaic_0001>
module attributes {stable_mosaic.version = 11 : i64} {
  func.func @regression_kernel(%arg0: i32, %arg1: memref<16x8xf32, #tpu.memory_space<vmem>>, %arg2: memref<128x8xf32, #tpu.memory_space<vmem>>, %arg3: memref<128x1xf32, #tpu.memory_space<vmem>>, %arg4: memref<128x128xbf16, #tpu.memory_space<vmem>>, %arg5: memref<128x1xf32, #tpu.memory_space<vmem>>, %arg6: memref<128x128xbf16, #tpu.memory_space<vmem>>, %arg7: memref<128x1xf32, #tpu.memory_space<vmem>>, %arg8: memref<64x128xbf16, #tpu.memory_space<vmem>>, %arg9: memref<64x1xf32, #tpu.memory_space<vmem>>, %arg10: memref<64x1xf32, #tpu.memory_space<vmem>>, %arg11: memref<1x1xf32, #tpu.memory_space<vmem>>, %arg12: memref<1x16xf32, #tpu.memory_space<vmem>>) attributes {dimension_semantics = [#tpu.dimension_semantics<parallel>], iteration_bounds = array<i64: 1>, scalar_prefetch = 0 : i64, scratch_operands = 0 : i64, tpu.core_type = #tpu.core_type<tc>, window_params = [{transform_indices = @transform_0, window_bounds = array<i64: 16, 8>}, {pipeline_mode = #tpu.pipeline_mode<synchronous>, transform_indices = @transform_1, window_bounds = array<i64: 128, 8>}, {pipeline_mode = #tpu.pipeline_mode<synchronous>, transform_indices = @transform_2, window_bounds = array<i64: 128, 1>}, {pipeline_mode = #tpu.pipeline_mode<synchronous>, transform_indices = @transform_3, window_bounds = array<i64: 128, 128>}, {pipeline_mode = #tpu.pipeline_mode<synchronous>, transform_indices = @transform_4, window_bounds = array<i64: 128, 1>}, {pipeline_mode = #tpu.pipeline_mode<synchronous>, transform_indices = @transform_5, window_bounds = array<i64: 128, 128>}, {pipeline_mode = #tpu.pipeline_mode<synchronous>, transform_indices = @transform_6, window_bounds = array<i64: 128, 1>}, {pipeline_mode = #tpu.pipeline_mode<synchronous>, transform_indices = @transform_7, window_bounds = array<i64: 64, 128>}, {pipeline_mode = #tpu.pipeline_mode<synchronous>, transform_indices = @transform_8, window_bounds = array<i64: 64, 1>}, {pipeline_mode = #tpu.pipeline_mode<synchronous>, transform_indices = @transform_9, window_bounds = array<i64: 64, 1>}, {pipeline_mode = #tpu.pipeline_mode<synchronous>, transform_indices = @transform_10, window_bounds = array<i64: 1, 1>}, {transform_indices = @transform_11, window_bounds = array<i64: 1, 16>}]} {
    %c0 = arith.constant 0 : index
    %c0_0 = arith.constant 0 : index
    %0 = vector.load %arg2[%c0, %c0_0] : memref<128x8xf32, #tpu.memory_space<vmem>>, vector<128x8xf32>
    %c0_1 = arith.constant 0 : index
    %c0_2 = arith.constant 0 : index
    %1 = vector.load %arg1[%c0_1, %c0_2] : memref<16x8xf32, #tpu.memory_space<vmem>>, vector<16x8xf32>
    %cst = arith.constant dense<0.000000e+00> : vector<128x16xf32>
    %2 = tpu.matmul %0, %1, %cst {dimension_numbers = #tpu.dot_dimension_numbers<[1], [1], [0], [0], [0, 0, 1, 0], [], []>} : vector<128x8xf32>, vector<16x8xf32>, vector<128x16xf32> -> vector<128x16xf32>
    %c0_3 = arith.constant 0 : index
    %c0_4 = arith.constant 0 : index
    %3 = vector.load %arg3[%c0_3, %c0_4] : memref<128x1xf32, #tpu.memory_space<vmem>>, vector<128x1xf32>
    %4 = vector.broadcast %3 : vector<128x1xf32> to vector<128x16xf32>
    %5 = arith.addf %2, %4 : vector<128x16xf32>
    %cst_5 = arith.constant 0.00999999977 : f32
    %6 = vector.broadcast %cst_5 : f32 to vector<128x16xf32>
    %7 = arith.mulf %6, %5 : vector<128x16xf32>
    %8 = arith.maximumf %5, %7 : vector<128x16xf32>
    %9 = arith.truncf %8 : vector<128x16xf32> to vector<128x16xbf16>
    %c0_6 = arith.constant 0 : index
    %c0_7 = arith.constant 0 : index
    %10 = vector.load %arg4[%c0_6, %c0_7] : memref<128x128xbf16, #tpu.memory_space<vmem>>, vector<128x128xbf16>
    %cst_8 = arith.constant dense<0.000000e+00> : vector<128x16xf32>
    %11 = tpu.matmul %10, %9, %cst_8 {dimension_numbers = #tpu.dot_dimension_numbers<[1], [0], [0], [1], [0, 0, 1, 1], [], []>} : vector<128x128xbf16>, vector<128x16xbf16>, vector<128x16xf32> -> vector<128x16xf32>
    %c0_9 = arith.constant 0 : index
    %c0_10 = arith.constant 0 : index
    %12 = vector.load %arg5[%c0_9, %c0_10] : memref<128x1xf32, #tpu.memory_space<vmem>>, vector<128x1xf32>
    %13 = vector.broadcast %12 : vector<128x1xf32> to vector<128x16xf32>
    %14 = arith.addf %11, %13 : vector<128x16xf32>
    %cst_11 = arith.constant 0.00999999977 : f32
    %15 = vector.broadcast %cst_11 : f32 to vector<128x16xf32>
    %16 = arith.mulf %15, %14 : vector<128x16xf32>
    %17 = arith.maximumf %14, %16 : vector<128x16xf32>
    %18 = arith.truncf %17 : vector<128x16xf32> to vector<128x16xbf16>
    %c0_12 = arith.constant 0 : index
    %c0_13 = arith.constant 0 : index
    %19 = vector.load %arg6[%c0_12, %c0_13] : memref<128x128xbf16, #tpu.memory_space<vmem>>, vector<128x128xbf16>
    %cst_14 = arith.constant dense<0.000000e+00> : vector<128x16xf32>
    %20 = tpu.matmul %19, %18, %cst_14 {dimension_numbers = #tpu.dot_dimension_numbers<[1], [0], [0], [1], [0, 0, 1, 1], [], []>} : vector<128x128xbf16>, vector<128x16xbf16>, vector<128x16xf32> -> vector<128x16xf32>
    %c0_15 = arith.constant 0 : index
    %c0_16 = arith.constant 0 : index
    %21 = vector.load %arg7[%c0_15, %c0_16] : memref<128x1xf32, #tpu.memory_space<vmem>>, vector<128x1xf32>
    %22 = vector.broadcast %21 : vector<128x1xf32> to vector<128x16xf32>
    %23 = arith.addf %20, %22 : vector<128x16xf32>
    %cst_17 = arith.constant 0.00999999977 : f32
    %24 = vector.broadcast %cst_17 : f32 to vector<128x16xf32>
    %25 = arith.mulf %24, %23 : vector<128x16xf32>
    %26 = arith.maximumf %23, %25 : vector<128x16xf32>
    %27 = arith.truncf %26 : vector<128x16xf32> to vector<128x16xbf16>
    %c0_18 = arith.constant 0 : index
    %c0_19 = arith.constant 0 : index
    %28 = vector.load %arg8[%c0_18, %c0_19] : memref<64x128xbf16, #tpu.memory_space<vmem>>, vector<64x128xbf16>
    %cst_20 = arith.constant dense<0.000000e+00> : vector<64x16xf32>
    %29 = tpu.matmul %28, %27, %cst_20 {dimension_numbers = #tpu.dot_dimension_numbers<[1], [0], [0], [1], [0, 0, 1, 1], [], []>} : vector<64x128xbf16>, vector<128x16xbf16>, vector<64x16xf32> -> vector<64x16xf32>
    %c0_21 = arith.constant 0 : index
    %c0_22 = arith.constant 0 : index
    %30 = vector.load %arg9[%c0_21, %c0_22] : memref<64x1xf32, #tpu.memory_space<vmem>>, vector<64x1xf32>
    %31 = vector.broadcast %30 : vector<64x1xf32> to vector<64x16xf32>
    %32 = arith.addf %29, %31 : vector<64x16xf32>
    %cst_23 = arith.constant 0.00999999977 : f32
    %33 = vector.broadcast %cst_23 : f32 to vector<64x16xf32>
    %34 = arith.mulf %33, %32 : vector<64x16xf32>
    %35 = arith.maximumf %32, %34 : vector<64x16xf32>
    %36 = arith.truncf %35 : vector<64x16xf32> to vector<64x16xbf16>
    %c0_24 = arith.constant 0 : index
    %c0_25 = arith.constant 0 : index
    %37 = vector.load %arg10[%c0_24, %c0_25] : memref<64x1xf32, #tpu.memory_space<vmem>>, vector<64x1xf32>
    %38 = arith.extf %36 : vector<64x16xbf16> to vector<64x16xf32>
    %39 = vector.broadcast %37 : vector<64x1xf32> to vector<64x16xf32>
    %40 = arith.mulf %39, %38 : vector<64x16xf32>
    %cst_26 = arith.constant dense<0.000000e+00> : vector<16xf32>
    %41 = vector.multi_reduction <add>, %40, %cst_26 [0] : vector<64x16xf32> to vector<16xf32>
    %42 = vector.shape_cast %41 : vector<16xf32> to vector<1x16xf32>
    %c0_27 = arith.constant 0 : index
    %c0_28 = arith.constant 0 : index
    %43 = vector.load %arg11[%c0_27, %c0_28] : memref<1x1xf32, #tpu.memory_space<vmem>>, vector<1x1xf32>
    %44 = vector.broadcast %43 : vector<1x1xf32> to vector<1x16xf32>
    %45 = arith.addf %42, %44 : vector<1x16xf32>
    %c0_29 = arith.constant 0 : index
    %c0_30 = arith.constant 0 : index
    %46 = vector.load %arg12[%c0_29, %c0_30] : memref<1x16xf32, #tpu.memory_space<vmem>>, vector<1x16xf32>
    tpu.vector_store %arg12[%c0_29, %c0_30], %45 {strides = array<i32>} : memref<1x16xf32, #tpu.memory_space<vmem>>, vector<1x16xf32>,
    return
  }
  func.func @transform_0(%arg0: i32) -> (i32, i32) {
    %c0_i32 = arith.constant 0 : i32
    %c0_i32_0 = arith.constant 0 : i32
    return %arg0, %c0_i32 : i32, i32
  }
  func.func @transform_1(%arg0: i32) -> (i32, i32) {
    %c0_i32 = arith.constant 0 : i32
    %c0_i32_0 = arith.constant 0 : i32
    %c0_i32_1 = arith.constant 0 : i32
    return %c0_i32, %c0_i32_0 : i32, i32
  }
  func.func @transform_2(%arg0: i32) -> (i32, i32) {
    %c0_i32 = arith.constant 0 : i32
    %c0_i32_0 = arith.constant 0 : i32
    %c0_i32_1 = arith.constant 0 : i32
    return %c0_i32, %c0_i32_0 : i32, i32
  }
  func.func @transform_3(%arg0: i32) -> (i32, i32) {
    %c0_i32 = arith.constant 0 : i32
    %c0_i32_0 = arith.constant 0 : i32
    %c0_i32_1 = arith.constant 0 : i32
    return %c0_i32, %c0_i32_0 : i32, i32
  }
  func.func @transform_4(%arg0: i32) -> (i32, i32) {
    %c0_i32 = arith.constant 0 : i32
    %c0_i32_0 = arith.constant 0 : i32
    %c0_i32_1 = arith.constant 0 : i32
    return %c0_i32, %c0_i32_0 : i32, i32
  }
  func.func @transform_5(%arg0: i32) -> (i32, i32) {
    %c0_i32 = arith.constant 0 : i32
    %c0_i32_0 = arith.constant 0 : i32
    %c0_i32_1 = arith.constant 0 : i32
    return %c0_i32, %c0_i32_0 : i32, i32
  }
  func.func @transform_6(%arg0: i32) -> (i32, i32) {
    %c0_i32 = arith.constant 0 : i32
    %c0_i32_0 = arith.constant 0 : i32
    %c0_i32_1 = arith.constant 0 : i32
    return %c0_i32, %c0_i32_0 : i32, i32
  }
  func.func @transform_7(%arg0: i32) -> (i32, i32) {
    %c0_i32 = arith.constant 0 : i32
    %c0_i32_0 = arith.constant 0 : i32
    %c0_i32_1 = arith.constant 0 : i32
    return %c0_i32, %c0_i32_0 : i32, i32
  }
  func.func @transform_8(%arg0: i32) -> (i32, i32) {
    %c0_i32 = arith.constant 0 : i32
    %c0_i32_0 = arith.constant 0 : i32
    %c0_i32_1 = arith.constant 0 : i32
    return %c0_i32, %c0_i32_0 : i32, i32
  }
  func.func @transform_9(%arg0: i32) -> (i32, i32) {
    %c0_i32 = arith.constant 0 : i32
    %c0_i32_0 = arith.constant 0 : i32
    %c0_i32_1 = arith.constant 0 : i32
    return %c0_i32, %c0_i32_0 : i32, i32
  }
  func.func @transform_10(%arg0: i32) -> (i32, i32) {
    %c0_i32 = arith.constant 0 : i32
    %c0_i32_0 = arith.constant 0 : i32
    %c0_i32_1 = arith.constant 0 : i32
    return %c0_i32, %c0_i32_0 : i32, i32
  }
  func.func @transform_11(%arg0: i32) -> (i32, i32) {
    %c0_i32 = arith.constant 0 : i32
    %c0_i32_0 = arith.constant 0 : i32
    return %c0_i32, %arg0 : i32, i32
  }
}

</mosaic_0001>

<llo_original>
// kernel: tpu_custom_call.1
$region0: #{tpu_custom_call.1}
  #allocation0 [shape = 'u32[]', space=smem, size = 0x4, offset = 0x4, fixed_abs, tag = 'smem constant byte address 0x4 - core index']
  #allocation1 [shape = 'u32[144,128]{1,0:T(1,128)}', space=vmem, size = 0x12000, scoped, tag = 'internal scratch']
  #allocation2 [shape = 'f32[1,1]{1,0:T(1,128)S(1)}', space=vmem, size = 0x200, scoped, tag = 'scoped memory for tpu_custom_call.1']
  %s0 = inlined_call_operand.vmem [shape: f32[16,8], index: 0, kind: input, shape index: {}]
  %s1 = inlined_call_operand.vmem [shape: f32[128,8], index: 1, kind: input, shape index: {}]
  %s2 = inlined_call_operand.vmem [shape: f32[128,1], index: 2, kind: input, shape index: {}]
  %s3 = inlined_call_operand.vmem [shape: bf16[128,128], index: 3, kind: input, shape index: {}]
  %s4 = inlined_call_operand.vmem [shape: f32[128,1], index: 4, kind: input, shape index: {}]
  %s5 = inlined_call_operand.vmem [shape: bf16[128,128], index: 5, kind: input, shape index: {}]
  %s6 = inlined_call_operand.vmem [shape: f32[128,1], index: 6, kind: input, shape index: {}]
  %s7 = inlined_call_operand.vmem [shape: bf16[64,128], index: 7, kind: input, shape index: {}]
  %s8 = inlined_call_operand.vmem [shape: f32[64,1], index: 8, kind: input, shape index: {}]
  %s9 = inlined_call_operand.vmem [shape: f32[64,1], index: 9, kind: input, shape index: {}]
  %s10 = inlined_call_operand.<no memory space> [shape: f32[1,1], index: 10, kind: input, shape index: {}]
  %s11 = inlined_call_operand.hbm [shape: f32[1,16], index: 11, kind: output, shape index: {}]
  %s12 = sld [smem:[#allocation0]]
  $region54: #{tpu_custom_call.1} parent=0
    _
  %s14 = ssub.s32 1, %s12
  %s15 = scalar_select 0, %s14, %s12
  %v16 = vstv %s10
  %17 = vst [vmem:[#allocation2] sm:$0x1] %v16
  $region1: #{tpu_custom_call.1} parent=0
    #allocation3 [shape = 'u8[512]{0}', space=vmem, size = 0x400, scoped, tag = 'output window, operand 0, single buffered']
    #allocation4 [shape = 's32[1]{0}', space=sflag, size = 0x4, scoped, tag = 'scoped memory for tpu_custom_call.1']
    %18 = vsyncpa [#allocation4], 0
    // Predicated region
    $region2: #{tpu_custom_call.1} parent=1 // pred_check
      _
    $region3: #{tpu_custom_call.1} parent=1 // pred_check_branch
      %20 = sbr.rel (0) target = $region5
    $region4: #{tpu_custom_call.1} parent=1 // pred_region
      _
    $region5: #{tpu_custom_call.1} parent=1 // pred_fallthru
      _
    // Predicated region
    $region6: #{tpu_custom_call.1} parent=1 // pred_check
      _
    $region7: #{tpu_custom_call.1} parent=1 // pred_check_branch
      %22 = sbr.rel (0) target = $region9
    $region8: #{tpu_custom_call.1} parent=1 // pred_region
      _
    $region9: #{tpu_custom_call.1} parent=1 // pred_fallthru
      _
    // Predicated region
    $region10: #{tpu_custom_call.1} parent=1 // pred_check
      _
    $region11: #{tpu_custom_call.1} parent=1 // pred_check_branch
      %24 = sbr.rel (0) target = $region13
    $region12: #{tpu_custom_call.1} parent=1 // pred_region
      _
    $region13: #{tpu_custom_call.1} parent=1 // pred_fallthru
      _
    // Predicated region
    $region14: #{tpu_custom_call.1} parent=1 // pred_check
      _
    $region15: #{tpu_custom_call.1} parent=1 // pred_check_branch
      %26 = sbr.rel (0) target = $region17
    $region16: #{tpu_custom_call.1} parent=1 // pred_region
      _
    $region17: #{tpu_custom_call.1} parent=1 // pred_fallthru
      _
    // Predicated region
    $region18: #{tpu_custom_call.1} parent=1 // pred_check
      _
    $region19: #{tpu_custom_call.1} parent=1 // pred_check_branch
      %28 = sbr.rel (0) target = $region21
    $region20: #{tpu_custom_call.1} parent=1 // pred_region
      _
    $region21: #{tpu_custom_call.1} parent=1 // pred_fallthru
      _
    // Predicated region
    $region22: #{tpu_custom_call.1} parent=1 // pred_check
      _
    $region23: #{tpu_custom_call.1} parent=1 // pred_check_branch
      %30 = sbr.rel (0) target = $region25
    $region24: #{tpu_custom_call.1} parent=1 // pred_region
      _
    $region25: #{tpu_custom_call.1} parent=1 // pred_fallthru
      _
    // Predicated region
    $region26: #{tpu_custom_call.1} parent=1 // pred_check
      _
    $region27: #{tpu_custom_call.1} parent=1 // pred_check_branch
      %32 = sbr.rel (0) target = $region29
    $region28: #{tpu_custom_call.1} parent=1 // pred_region
      _
    $region29: #{tpu_custom_call.1} parent=1 // pred_fallthru
      _
    // Predicated region
    $region30: #{tpu_custom_call.1} parent=1 // pred_check
      _
    $region31: #{tpu_custom_call.1} parent=1 // pred_check_branch
      %34 = sbr.rel (0) target = $region33
    $region32: #{tpu_custom_call.1} parent=1 // pred_region
      _
    $region33: #{tpu_custom_call.1} parent=1 // pred_fallthru
      _
    // Predicated region
    $region34: #{tpu_custom_call.1} parent=1 // pred_check
      _
    $region35: #{tpu_custom_call.1} parent=1 // pred_check_branch
      %36 = sbr.rel (0) target = $region37
    $region36: #{tpu_custom_call.1} parent=1 // pred_region
      _
    $region37: #{tpu_custom_call.1} parent=1 // pred_fallthru
      _
    // Predicated region
    $region38: #{tpu_custom_call.1} parent=1 // pred_check
      _
    $region39: #{tpu_custom_call.1} parent=1 // pred_check_branch
      %38 = sbr.rel (0) target = $region41
    $region40: #{tpu_custom_call.1} parent=1 // pred_region
      _
    $region41: #{tpu_custom_call.1} parent=1 // pred_fallthru
      _
    // Predicated region
    $region42: #{tpu_custom_call.1} parent=1 // pred_check
      _
    $region43: #{tpu_custom_call.1} parent=1 // pred_check_branch
      %40 = sbr.rel (0) target = $region45
    $region44: #{tpu_custom_call.1} parent=1 // pred_region
      _
    $region45: #{tpu_custom_call.1} parent=1 // pred_fallthru
      _
    %v42 = vld [vmem:[%s1] sm:$0xff]
    %v43 = vld [vmem:[%s1 + $0x8] sm:$0xff]
    %v44 = vld [vmem:[%s1 + $0x10] sm:$0xff]
    %v45 = vld [vmem:[%s1 + $0x18] sm:$0xff]
    %v46 = vld [vmem:[%s1 + $0x20] sm:$0xff]
    %v47 = vld [vmem:[%s1 + $0x28] sm:$0xff]
    %v48 = vld [vmem:[%s1 + $0x30] sm:$0xff]
    %v49 = vld [vmem:[%s1 + $0x38] sm:$0xff]
    %v50 = vld [vmem:[%s1 + $0x40] sm:$0xff]
    %v51 = vld [vmem:[%s1 + $0x48] sm:$0xff]
    %v52 = vld [vmem:[%s1 + $0x50] sm:$0xff]
    %v53 = vld [vmem:[%s1 + $0x58] sm:$0xff]
    %v54 = vld [vmem:[%s1 + $0x60] sm:$0xff]
    %v55 = vld [vmem:[%s1 + $0x68] sm:$0xff]
    %v56 = vld [vmem:[%s1 + $0x70] sm:$0xff]
    %v57 = vld [vmem:[%s1 + $0x78] sm:$0xff]
    %v58 = vld [vmem:[%s0] sm:$0xff]
    %v59 = vld [vmem:[%s0 + $0x8] sm:$0xff]
    %v60 = vld [vmem:[%s2] sm:$0xff]
    %v61 = vld [vmem:[%s2 + $0x8] sm:$0xff]
    %v62 = vld [vmem:[%s2 + $0x10] sm:$0xff]
    %v63 = vld [vmem:[%s2 + $0x18] sm:$0xff]
    %v64 = vld [vmem:[%s2 + $0x20] sm:$0xff]
    %v65 = vld [vmem:[%s2 + $0x28] sm:$0xff]
    %v66 = vld [vmem:[%s2 + $0x30] sm:$0xff]
    %v67 = vld [vmem:[%s2 + $0x38] sm:$0xff]
    %v68 = vld [vmem:[%s2 + $0x40] sm:$0xff]
    %v69 = vld [vmem:[%s2 + $0x48] sm:$0xff]
    %v70 = vld [vmem:[%s2 + $0x50] sm:$0xff]
    %v71 = vld [vmem:[%s2 + $0x58] sm:$0xff]
    %v72 = vld [vmem:[%s2 + $0x60] sm:$0xff]
    %v73 = vld [vmem:[%s2 + $0x68] sm:$0xff]
    %v74 = vld [vmem:[%s2 + $0x70] sm:$0xff]
    %v75 = vld [vmem:[%s2 + $0x78] sm:$0xff]
    %77 = vset.pattern.permute.xlu0 0
    %78 = vperm.xlu0 %77, %v60
    %v79 = vpop.permute.xlu0 %78
    %82 = vset.pattern.permute.xlu0 0
    %83 = vperm.xlu0 %82, %v61
    %v84 = vpop.permute.xlu0 %83
    %87 = vset.pattern.permute.xlu0 0
    %88 = vperm.xlu0 %87, %v62
    %v89 = vpop.permute.xlu0 %88
    %92 = vset.pattern.permute.xlu0 0
    %93 = vperm.xlu0 %92, %v63
    %v94 = vpop.permute.xlu0 %93
    %97 = vset.pattern.permute.xlu0 0
    %98 = vperm.xlu0 %97, %v64
    %v99 = vpop.permute.xlu0 %98
    %102 = vset.pattern.permute.xlu0 0
    %103 = vperm.xlu0 %102, %v65
    %v104 = vpop.permute.xlu0 %103
    %107 = vset.pattern.permute.xlu0 0
    %108 = vperm.xlu0 %107, %v66
    %v109 = vpop.permute.xlu0 %108
    %112 = vset.pattern.permute.xlu0 0
    %113 = vperm.xlu0 %112, %v67
    %v114 = vpop.permute.xlu0 %113
    %117 = vset.pattern.permute.xlu0 0
    %118 = vperm.xlu0 %117, %v68
    %v119 = vpop.permute.xlu0 %118
    %122 = vset.pattern.permute.xlu0 0
    %123 = vperm.xlu0 %122, %v69
    %v124 = vpop.permute.xlu0 %123
    %127 = vset.pattern.permute.xlu0 0
    %128 = vperm.xlu0 %127, %v70
    %v129 = vpop.permute.xlu0 %128
    %132 = vset.pattern.permute.xlu0 0
    %133 = vperm.xlu0 %132, %v71
    %v134 = vpop.permute.xlu0 %133
    %137 = vset.pattern.permute.xlu0 0
    %138 = vperm.xlu0 %137, %v72
    %v139 = vpop.permute.xlu0 %138
    %142 = vset.pattern.permute.xlu0 0
    %143 = vperm.xlu0 %142, %v73
    %v144 = vpop.permute.xlu0 %143
    %147 = vset.pattern.permute.xlu0 0
    %148 = vperm.xlu0 %147, %v74
    %v149 = vpop.permute.xlu0 %148
    %152 = vset.pattern.permute.xlu0 0
    %153 = vperm.xlu0 %152, %v75
    %v154 = vpop.permute.xlu0 %153
    %vm156 = vcmask 64512
    %v158 = vsel %vm156, %v42, 0
    %v161 = vsel %vm156, %v43, 0
    %v164 = vsel %vm156, %v44, 0
    %v167 = vsel %vm156, %v45, 0
    %v170 = vsel %vm156, %v46, 0
    %v173 = vsel %vm156, %v47, 0
    %v176 = vsel %vm156, %v48, 0
    %v179 = vsel %vm156, %v49, 0
    %v182 = vsel %vm156, %v50, 0
    %v185 = vsel %vm156, %v51, 0
    %v188 = vsel %vm156, %v52, 0
    %v191 = vsel %vm156, %v53, 0
    %v194 = vsel %vm156, %v54, 0
    %v197 = vsel %vm156, %v55, 0
    %v200 = vsel %vm156, %v56, 0
    %v203 = vsel %vm156, %v57, 0
    %v206 = vsel %vm156, %v58, 0
    %v209 = vsel %vm156, %v59, 0
    %211 = vmatprep.subr.mxu0 0.0
    %212 = vmatpush1.xpose.msra.mxu0 0.0
    %213 = vmatprep.subr.mxu0 0.0
    %214 = vmatpush1.xpose.msra.mxu0 0.0
    %215 = vmatprep.subr.mxu0 0.0
    %216 = vmatpush1.xpose.msra.mxu0 0.0
    %217 = vmatprep.subr.mxu0 0.0
    %218 = vmatpush1.xpose.msra.mxu0 0.0
    %219 = vmatprep.subr.mxu0 0.0
    %220 = vmatpush1.xpose.msra.mxu0 0.0
    %221 = vmatprep.subr.mxu0 0.0
    %222 = vmatpush1.xpose.msra.mxu0 0.0
    %223 = vmatprep.subr.mxu0 0.0
    %224 = vmatpush1.xpose.msra.mxu0 0.0
    %225 = vmatprep.subr.mxu0 0.0
    %226 = vmatpush1.xpose.msra.mxu0 0.0
    %227 = vmatprep.subr.mxu0 0.0
    %228 = vmatpush1.xpose.msra.mxu0 0.0
    %229 = vmatprep.subr.mxu0 0.0
    %230 = vmatpush1.xpose.msra.mxu0 0.0
    %231 = vmatprep.subr.mxu0 0.0
    %232 = vmatpush1.xpose.msra.mxu0 0.0
    %233 = vmatprep.subr.mxu0 0.0
    %234 = vmatpush1.xpose.msra.mxu0 0.0
    %235 = vmatprep.subr.mxu0 0.0
    %236 = vmatpush1.xpose.msra.mxu0 0.0
    %237 = vmatprep.subr.mxu0 0.0
    %238 = vmatpush1.xpose.msra.mxu0 0.0
    %239 = vmatprep.subr.mxu0 0.0
    %240 = vmatpush1.xpose.msra.mxu0 %v209
    %241 = vmatprep.subr.mxu0 0.0
    %242 = vmatpush1.xpose.msra.mxu0 %v206
    %243 = vmatprep.subr.mxu0 0.0
    %244 = vmatpush2.xpose.msra.mxu0 0.0
    %245 = vmatprep.subr.mxu0 0.0
    %246 = vmatpush2.xpose.msra.mxu0 0.0
    %247 = vmatprep.subr.mxu0 0.0
    %248 = vmatpush2.xpose.msra.mxu0 0.0
    %249 = vmatprep.subr.mxu0 0.0
    %250 = vmatpush2.xpose.msra.mxu0 0.0
    %251 = vmatprep.subr.mxu0 0.0
    %252 = vmatpush2.xpose.msra.mxu0 0.0
    %253 = vmatprep.subr.mxu0 0.0
    %254 = vmatpush2.xpose.msra.mxu0 0.0
    %255 = vmatprep.subr.mxu0 0.0
    %256 = vmatpush2.xpose.msra.mxu0 0.0
    %257 = vmatprep.subr.mxu0 0.0
    %258 = vmatpush2.xpose.msra.mxu0 0.0
    %259 = vmatprep.subr.mxu0 0.0
    %260 = vmatpush2.xpose.msra.mxu0 0.0
    %261 = vmatprep.subr.mxu0 0.0
    %262 = vmatpush2.xpose.msra.mxu0 0.0
    %263 = vmatprep.subr.mxu0 0.0
    %264 = vmatpush2.xpose.msra.mxu0 0.0
    %265 = vmatprep.subr.mxu0 0.0
    %266 = vmatpush2.xpose.msra.mxu0 0.0
    %267 = vmatprep.subr.mxu0 0.0
    %268 = vmatpush2.xpose.msra.mxu0 0.0
    %269 = vmatprep.subr.mxu0 0.0
    %270 = vmatpush2.xpose.msra.mxu0 0.0
    %271 = vmatprep.subr.mxu0 0.0
    %272 = vmatpush2.xpose.msra.mxu0 0.0
    %273 = vmatprep.subr.mxu0 0.0
    %274 = vmatpush2.xpose.msra.mxu0 0.0
    %275 = vmatprep.mubr.f32.mxu0 0.0
    %276 = vmatmul.mubr.f32.gmra.mxu0 %v158
    %v277 = vpop.f32.mrf.mxu0
    %v278 = vadd.f32 %v79, %v277
    %v279 = vpop.f32.mrf.mxu0
    %280 = vmatprep.mubr.f32.mxu0 0.0
    %281 = vmatmul.mubr.f32.gmra.mxu0 %v161
    %v282 = vpop.f32.mrf.mxu0
    %v283 = vadd.f32 %v84, %v282
    %v284 = vpop.f32.mrf.mxu0
    %285 = vmatprep.mubr.f32.mxu0 0.0
    %286 = vmatmul.mubr.f32.gmra.mxu0 %v164
    %v287 = vpop.f32.mrf.mxu0
    %v288 = vadd.f32 %v89, %v287
    %v289 = vpop.f32.mrf.mxu0
    %290 = vmatprep.mubr.f32.mxu0 0.0
    %291 = vmatmul.mubr.f32.gmra.mxu0 %v167
    %v292 = vpop.f32.mrf.mxu0
    %v293 = vadd.f32 %v94, %v292
    %v294 = vpop.f32.mrf.mxu0
    %295 = vmatprep.mubr.f32.mxu0 0.0
    %296 = vmatmul.mubr.f32.gmra.mxu0 %v170
    %v297 = vpop.f32.mrf.mxu0
    %v298 = vadd.f32 %v99, %v297
    %v299 = vpop.f32.mrf.mxu0
    %300 = vmatprep.mubr.f32.mxu0 0.0
    %301 = vmatmul.mubr.f32.gmra.mxu0 %v173
    %v302 = vpop.f32.mrf.mxu0
    %v303 = vadd.f32 %v104, %v302
    %v304 = vpop.f32.mrf.mxu0
    %305 = vmatprep.mubr.f32.mxu0 0.0
    %306 = vmatmul.mubr.f32.gmra.mxu0 %v176
    %v307 = vpop.f32.mrf.mxu0
    %v308 = vadd.f32 %v109, %v307
    %v309 = vpop.f32.mrf.mxu0
    %310 = vmatprep.mubr.f32.mxu0 0.0
    %311 = vmatmul.mubr.f32.gmra.mxu0 %v179
    %v312 = vpop.f32.mrf.mxu0
    %v313 = vadd.f32 %v114, %v312
    %v314 = vpop.f32.mrf.mxu0
    %315 = vmatprep.mubr.f32.mxu0 0.0
    %316 = vmatmul.mubr.f32.gmra.mxu0 %v182
    %v317 = vpop.f32.mrf.mxu0
    %v318 = vadd.f32 %v119, %v317
    %v319 = vpop.f32.mrf.mxu0
    %320 = vmatprep.mubr.f32.mxu0 0.0
    %321 = vmatmul.mubr.f32.gmra.mxu0 %v185
    %v322 = vpop.f32.mrf.mxu0
    %v323 = vadd.f32 %v124, %v322
    %v324 = vpop.f32.mrf.mxu0
    %325 = vmatprep.mubr.f32.mxu0 0.0
    %326 = vmatmul.mubr.f32.gmra.mxu0 %v188
    %v327 = vpop.f32.mrf.mxu0
    %v328 = vadd.f32 %v129, %v327
    %v329 = vpop.f32.mrf.mxu0
    %330 = vmatprep.mubr.f32.mxu0 0.0
    %331 = vmatmul.mubr.f32.gmra.mxu0 %v191
    %v332 = vpop.f32.mrf.mxu0
    %v333 = vadd.f32 %v134, %v332
    %v334 = vpop.f32.mrf.mxu0
    %335 = vmatprep.mubr.f32.mxu0 0.0
    %336 = vmatmul.mubr.f32.gmra.mxu0 %v194
    %v337 = vpop.f32.mrf.mxu0
    %v338 = vadd.f32 %v139, %v337
    %v339 = vpop.f32.mrf.mxu0
    %340 = vmatprep.mubr.f32.mxu0 0.0
    %341 = vmatmul.mubr.f32.gmra.mxu0 %v197
    %v342 = vpop.f32.mrf.mxu0
    %v343 = vadd.f32 %v144, %v342
    %v344 = vpop.f32.mrf.mxu0
    %345 = vmatprep.mubr.f32.mxu0 0.0
    %346 = vmatmul.mubr.f32.gmra.mxu0 %v200
    %v347 = vpop.f32.mrf.mxu0
    %v348 = vadd.f32 %v149, %v347
    %v349 = vpop.f32.mrf.mxu0
    %350 = vmatprep.mubr.f32.mxu0 0.0
    %351 = vmatmul.mubr.f32.gmra.mxu0 %v203
    %v352 = vpop.f32.mrf.mxu0
    %v353 = vadd.f32 %v154, %v352
    %v354 = vpop.f32.mrf.mxu0
    %355 = vdwg.mxu0
    %v356 = vmul.f32 %v278, 0.01
    %v357 = vmul.f32 %v283, 0.01
    %v358 = vmul.f32 %v288, 0.01
    %v359 = vmul.f32 %v293, 0.01
    %v360 = vmul.f32 %v298, 0.01
    %v361 = vmul.f32 %v303, 0.01
    %v362 = vmul.f32 %v308, 0.01
    %v363 = vmul.f32 %v313, 0.01
    %v364 = vmul.f32 %v318, 0.01
    %v365 = vmul.f32 %v323, 0.01
    %v366 = vmul.f32 %v328, 0.01
    %v367 = vmul.f32 %v333, 0.01
    %v368 = vmul.f32 %v338, 0.01
    %v369 = vmul.f32 %v343, 0.01
    %v370 = vmul.f32 %v348, 0.01
    %v371 = vmul.f32 %v353, 0.01
    %v372 = vmax.f32 %v278, %v356
    %v373 = vmax.f32 %v283, %v357
    %v374 = vmax.f32 %v288, %v358
    %v375 = vmax.f32 %v293, %v359
    %v376 = vmax.f32 %v298, %v360
    %v377 = vmax.f32 %v303, %v361
    %v378 = vmax.f32 %v308, %v362
    %v379 = vmax.f32 %v313, %v363
    %v380 = vmax.f32 %v318, %v364
    %v381 = vmax.f32 %v323, %v365
    %v382 = vmax.f32 %v328, %v366
    %v383 = vmax.f32 %v333, %v367
    %v384 = vmax.f32 %v338, %v368
    %v385 = vmax.f32 %v343, %v369
    %v386 = vmax.f32 %v348, %v370
    %v387 = vmax.f32 %v353, %v371
    %v388 = vpack.c.bf16 %v373, %v372
    %v389 = vpack.c.bf16 %v375, %v374
    %v390 = vpack.c.bf16 %v377, %v376
    %v391 = vpack.c.bf16 %v379, %v378
    %v392 = vpack.c.bf16 %v381, %v380
    %v393 = vpack.c.bf16 %v383, %v382
    %v394 = vpack.c.bf16 %v385, %v384
    %v395 = vpack.c.bf16 %v387, %v386
    %v396 = vld [vmem:[%s3] sm:$0xf]
    %v397 = vld [vmem:[%s3 + $0x4] sm:$0xf]
    %v398 = vld [vmem:[%s3 + $0x8] sm:$0xf]
    %v399 = vld [vmem:[%s3 + $0xc] sm:$0xf]
    %v400 = vld [vmem:[%s3 + $0x10] sm:$0xf]
    %v401 = vld [vmem:[%s3 + $0x14] sm:$0xf]
    %v402 = vld [vmem:[%s3 + $0x18] sm:$0xf]
    %v403 = vld [vmem:[%s3 + $0x1c] sm:$0xf]
    %v404 = vld [vmem:[%s3 + $0x20] sm:$0xf]
    %v405 = vld [vmem:[%s3 + $0x24] sm:$0xf]
    %v406 = vld [vmem:[%s3 + $0x28] sm:$0xf]
    %v407 = vld [vmem:[%s3 + $0x2c] sm:$0xf]
    %v408 = vld [vmem:[%s3 + $0x30] sm:$0xf]
    %v409 = vld [vmem:[%s3 + $0x34] sm:$0xf]
    %v410 = vld [vmem:[%s3 + $0x38] sm:$0xf]
    %v411 = vld [vmem:[%s3 + $0x3c] sm:$0xf]
    %v412 = vld [vmem:[%s4] sm:$0xff]
    %v413 = vld [vmem:[%s4 + $0x8] sm:$0xff]
    %v414 = vld [vmem:[%s4 + $0x10] sm:$0xff]
    %v415 = vld [vmem:[%s4 + $0x18] sm:$0xff]
    %v416 = vld [vmem:[%s4 + $0x20] sm:$0xff]
    %v417 = vld [vmem:[%s4 + $0x28] sm:$0xff]
    %v418 = vld [vmem:[%s4 + $0x30] sm:$0xff]
    %v419 = vld [vmem:[%s4 + $0x38] sm:$0xff]
    %v420 = vld [vmem:[%s4 + $0x40] sm:$0xff]
    %v421 = vld [vmem:[%s4 + $0x48] sm:$0xff]
    %v422 = vld [vmem:[%s4 + $0x50] sm:$0xff]
    %v423 = vld [vmem:[%s4 + $0x58] sm:$0xff]
    %v424 = vld [vmem:[%s4 + $0x60] sm:$0xff]
    %v425 = vld [vmem:[%s4 + $0x68] sm:$0xff]
    %v426 = vld [vmem:[%s4 + $0x70] sm:$0xff]
    %v427 = vld [vmem:[%s4 + $0x78] sm:$0xff]
    %429 = vset.pattern.permute.xlu0 0
    %430 = vperm.xlu0 %429, %v412
    %v431 = vpop.permute.xlu0 %430
    %434 = vset.pattern.permute.xlu0 0
    %435 = vperm.xlu0 %434, %v413
    %v436 = vpop.permute.xlu0 %435
    %439 = vset.pattern.permute.xlu0 0
    %440 = vperm.xlu0 %439, %v414
    %v441 = vpop.permute.xlu0 %440
    %444 = vset.pattern.permute.xlu0 0
    %445 = vperm.xlu0 %444, %v415
    %v446 = vpop.permute.xlu0 %445
    %449 = vset.pattern.permute.xlu0 0
    %450 = vperm.xlu0 %449, %v416
    %v451 = vpop.permute.xlu0 %450
    %454 = vset.pattern.permute.xlu0 0
    %455 = vperm.xlu0 %454, %v417
    %v456 = vpop.permute.xlu0 %455
    %459 = vset.pattern.permute.xlu0 0
    %460 = vperm.xlu0 %459, %v418
    %v461 = vpop.permute.xlu0 %460
    %464 = vset.pattern.permute.xlu0 0
    %465 = vperm.xlu0 %464, %v419
    %v466 = vpop.permute.xlu0 %465
    %469 = vset.pattern.permute.xlu0 0
    %470 = vperm.xlu0 %469, %v420
    %v471 = vpop.permute.xlu0 %470
    %474 = vset.pattern.permute.xlu0 0
    %475 = vperm.xlu0 %474, %v421
    %v476 = vpop.permute.xlu0 %475
    %479 = vset.pattern.permute.xlu0 0
    %480 = vperm.xlu0 %479, %v422
    %v481 = vpop.permute.xlu0 %480
    %484 = vset.pattern.permute.xlu0 0
    %485 = vperm.xlu0 %484, %v423
    %v486 = vpop.permute.xlu0 %485
    %489 = vset.pattern.permute.xlu0 0
    %490 = vperm.xlu0 %489, %v424
    %v491 = vpop.permute.xlu0 %490
    %494 = vset.pattern.permute.xlu0 0
    %495 = vperm.xlu0 %494, %v425
    %v496 = vpop.permute.xlu0 %495
    %499 = vset.pattern.permute.xlu0 0
    %500 = vperm.xlu0 %499, %v426
    %v501 = vpop.permute.xlu0 %500
    %504 = vset.pattern.permute.xlu0 0
    %505 = vperm.xlu0 %504, %v427
    %v506 = vpop.permute.xlu0 %505
    %v524 = vunpack.c.l.b16 %v396
    %v525 = vunpack.c.l.b16 %v397
    %v526 = vunpack.c.l.b16 %v398
    %v527 = vunpack.c.l.b16 %v399
    %v528 = vunpack.c.l.b16 %v400
    %v529 = vunpack.c.l.b16 %v401
    %v530 = vunpack.c.l.b16 %v402
    %v531 = vunpack.c.l.b16 %v403
    %v532 = vunpack.c.l.b16 %v404
    %v533 = vunpack.c.l.b16 %v405
    %v534 = vunpack.c.l.b16 %v406
    %v535 = vunpack.c.l.b16 %v407
    %v536 = vunpack.c.l.b16 %v408
    %v537 = vunpack.c.l.b16 %v409
    %v538 = vunpack.c.l.b16 %v410
    %v539 = vunpack.c.l.b16 %v411
    %v540 = vpack.c.b16 %v525, %v524
    %v541 = vpack.c.b16 %v527, %v526
    %v542 = vpack.c.b16 %v529, %v528
    %v543 = vpack.c.b16 %v531, %v530
    %v544 = vpack.c.b16 %v533, %v532
    %v545 = vpack.c.b16 %v535, %v534
    %v546 = vpack.c.b16 %v537, %v536
    %v547 = vpack.c.b16 %v539, %v538
    %556 = vmatprep.subr.bf16.mxu0 0
    %557 = vmatpush1.bf16.msra.mxu0 %v395
    %558 = vmatprep.subr.bf16.mxu0 0
    %559 = vmatpush1.bf16.msra.mxu0 %v394
    %560 = vmatprep.subr.bf16.mxu0 0
    %561 = vmatpush1.bf16.msra.mxu0 %v393
    %562 = vmatprep.subr.bf16.mxu0 0
    %563 = vmatpush1.bf16.msra.mxu0 %v392
    %564 = vmatprep.subr.bf16.mxu0 0
    %565 = vmatpush1.bf16.msra.mxu0 %v391
    %566 = vmatprep.subr.bf16.mxu0 0
    %567 = vmatpush1.bf16.msra.mxu0 %v390
    %568 = vmatprep.subr.bf16.mxu0 0
    %569 = vmatpush1.bf16.msra.mxu0 %v389
    %570 = vmatprep.subr.bf16.mxu0 0
    %571 = vmatpush1.bf16.msra.mxu0 %v388
    %572 = vmatprep.subr.bf16.mxu0 0
    %573 = vmatpush2.bf16.msra.mxu0 0
    %574 = vmatprep.subr.bf16.mxu0 0
    %575 = vmatpush2.bf16.msra.mxu0 0
    %576 = vmatprep.subr.bf16.mxu0 0
    %577 = vmatpush2.bf16.msra.mxu0 0
    %578 = vmatprep.subr.bf16.mxu0 0
    %579 = vmatpush2.bf16.msra.mxu0 0
    %580 = vmatprep.subr.bf16.mxu0 0
    %581 = vmatpush2.bf16.msra.mxu0 0
    %582 = vmatprep.subr.bf16.mxu0 0
    %583 = vmatpush2.bf16.msra.mxu0 0
    %584 = vmatprep.subr.bf16.mxu0 0
    %585 = vmatpush2.bf16.msra.mxu0 0
    %586 = vmatprep.subr.bf16.mxu0 0
    %587 = vmatpush2.bf16.msra.mxu0 0
    %588 = vmatprep.mubr.bf16.mxu0 0
    %589 = vmatmul.mubr.bf16.gmra.mxu0 %v540
    %v590 = vpop.f32.mrf.mxu0
    %v591 = vadd.f32 %v431, %v590
    %v592 = vpop.f32.mrf.mxu0
    %v593 = vpop.f32.mrf.mxu0
    %v594 = vadd.f32 %v436, %v593
    %v595 = vpop.f32.mrf.mxu0
    %596 = vmatprep.mubr.bf16.mxu0 0
    %597 = vmatmul.mubr.bf16.gmra.mxu0 %v541
    %v598 = vpop.f32.mrf.mxu0
    %v599 = vadd.f32 %v441, %v598
    %v600 = vpop.f32.mrf.mxu0
    %v601 = vpop.f32.mrf.mxu0
    %v602 = vadd.f32 %v446, %v601
    %v603 = vpop.f32.mrf.mxu0
    %604 = vmatprep.mubr.bf16.mxu0 0
    %605 = vmatmul.mubr.bf16.gmra.mxu0 %v542
    %v606 = vpop.f32.mrf.mxu0
    %v607 = vadd.f32 %v451, %v606
    %v608 = vpop.f32.mrf.mxu0
    %v609 = vpop.f32.mrf.mxu0
    %v610 = vadd.f32 %v456, %v609
    %v611 = vpop.f32.mrf.mxu0
    %612 = vmatprep.mubr.bf16.mxu0 0
    %613 = vmatmul.mubr.bf16.gmra.mxu0 %v543
    %v614 = vpop.f32.mrf.mxu0
    %v615 = vadd.f32 %v461, %v614
    %v616 = vpop.f32.mrf.mxu0
    %v617 = vpop.f32.mrf.mxu0
    %v618 = vadd.f32 %v466, %v617
    %v619 = vpop.f32.mrf.mxu0
    %620 = vmatprep.mubr.bf16.mxu0 0
    %621 = vmatmul.mubr.bf16.gmra.mxu0 %v544
    %v622 = vpop.f32.mrf.mxu0
    %v623 = vadd.f32 %v471, %v622
    %v624 = vpop.f32.mrf.mxu0
    %v625 = vpop.f32.mrf.mxu0
    %v626 = vadd.f32 %v476, %v625
    %v627 = vpop.f32.mrf.mxu0
    %628 = vmatprep.mubr.bf16.mxu0 0
    %629 = vmatmul.mubr.bf16.gmra.mxu0 %v545
    %v630 = vpop.f32.mrf.mxu0
    %v631 = vadd.f32 %v481, %v630
    %v632 = vpop.f32.mrf.mxu0
    %v633 = vpop.f32.mrf.mxu0
    %v634 = vadd.f32 %v486, %v633
    %v635 = vpop.f32.mrf.mxu0
    %636 = vmatprep.mubr.bf16.mxu0 0
    %637 = vmatmul.mubr.bf16.gmra.mxu0 %v546
    %v638 = vpop.f32.mrf.mxu0
    %v639 = vadd.f32 %v491, %v638
    %v640 = vpop.f32.mrf.mxu0
    %v641 = vpop.f32.mrf.mxu0
    %v642 = vadd.f32 %v496, %v641
    %v643 = vpop.f32.mrf.mxu0
    %644 = vmatprep.mubr.bf16.mxu0 0
    %645 = vmatmul.mubr.bf16.gmra.mxu0 %v547
    %v646 = vpop.f32.mrf.mxu0
    %v647 = vadd.f32 %v501, %v646
    %v648 = vpop.f32.mrf.mxu0
    %v649 = vpop.f32.mrf.mxu0
    %v650 = vadd.f32 %v506, %v649
    %v651 = vpop.f32.mrf.mxu0
    %652 = vdwg.mxu0
    %v653 = vmul.f32 %v591, 0.01
    %v654 = vmul.f32 %v594, 0.01
    %v655 = vmul.f32 %v599, 0.01
    %v656 = vmul.f32 %v602, 0.01
    %v657 = vmul.f32 %v607, 0.01
    %v658 = vmul.f32 %v610, 0.01
    %v659 = vmul.f32 %v615, 0.01
    %v660 = vmul.f32 %v618, 0.01
    %v661 = vmul.f32 %v623, 0.01
    %v662 = vmul.f32 %v626, 0.01
    %v663 = vmul.f32 %v631, 0.01
    %v664 = vmul.f32 %v634, 0.01
    %v665 = vmul.f32 %v639, 0.01
    %v666 = vmul.f32 %v642, 0.01
    %v667 = vmul.f32 %v647, 0.01
    %v668 = vmul.f32 %v650, 0.01
    %v669 = vmax.f32 %v591, %v653
    %v670 = vmax.f32 %v594, %v654
    %v671 = vmax.f32 %v599, %v655
    %v672 = vmax.f32 %v602, %v656
    %v673 = vmax.f32 %v607, %v657
    %v674 = vmax.f32 %v610, %v658
    %v675 = vmax.f32 %v615, %v659
    %v676 = vmax.f32 %v618, %v660
    %v677 = vmax.f32 %v623, %v661
    %v678 = vmax.f32 %v626, %v662
    %v679 = vmax.f32 %v631, %v663
    %v680 = vmax.f32 %v634, %v664
    %v681 = vmax.f32 %v639, %v665
    %v682 = vmax.f32 %v642, %v666
    %v683 = vmax.f32 %v647, %v667
    %v684 = vmax.f32 %v650, %v668
    %v685 = vpack.c.bf16 %v670, %v669
    %v686 = vpack.c.bf16 %v672, %v671
    %v687 = vpack.c.bf16 %v674, %v673
    %v688 = vpack.c.bf16 %v676, %v675
    %v689 = vpack.c.bf16 %v678, %v677
    %v690 = vpack.c.bf16 %v680, %v679
    %v691 = vpack.c.bf16 %v682, %v681
    %v692 = vpack.c.bf16 %v684, %v683
    %v693 = vld [vmem:[%s5] sm:$0xf]
    %v694 = vld [vmem:[%s5 + $0x4] sm:$0xf]
    %v695 = vld [vmem:[%s5 + $0x8] sm:$0xf]
    %v696 = vld [vmem:[%s5 + $0xc] sm:$0xf]
    %v697 = vld [vmem:[%s5 + $0x10] sm:$0xf]
    %v698 = vld [vmem:[%s5 + $0x14] sm:$0xf]
    %v699 = vld [vmem:[%s5 + $0x18] sm:$0xf]
    %v700 = vld [vmem:[%s5 + $0x1c] sm:$0xf]
    %v701 = vld [vmem:[%s5 + $0x20] sm:$0xf]
    %v702 = vld [vmem:[%s5 + $0x24] sm:$0xf]
    %v703 = vld [vmem:[%s5 + $0x28] sm:$0xf]
    %v704 = vld [vmem:[%s5 + $0x2c] sm:$0xf]
    %v705 = vld [vmem:[%s5 + $0x30] sm:$0xf]
    %v706 = vld [vmem:[%s5 + $0x34] sm:$0xf]
    %v707 = vld [vmem:[%s5 + $0x38] sm:$0xf]
    %v708 = vld [vmem:[%s5 + $0x3c] sm:$0xf]
    %v709 = vld [vmem:[%s6] sm:$0xff]
    %v710 = vld [vmem:[%s6 + $0x8] sm:$0xff]
    %v711 = vld [vmem:[%s6 + $0x10] sm:$0xff]
    %v712 = vld [vmem:[%s6 + $0x18] sm:$0xff]
    %v713 = vld [vmem:[%s6 + $0x20] sm:$0xff]
    %v714 = vld [vmem:[%s6 + $0x28] sm:$0xff]
    %v715 = vld [vmem:[%s6 + $0x30] sm:$0xff]
    %v716 = vld [vmem:[%s6 + $0x38] sm:$0xff]
    %v717 = vld [vmem:[%s6 + $0x40] sm:$0xff]
    %v718 = vld [vmem:[%s6 + $0x48] sm:$0xff]
    %v719 = vld [vmem:[%s6 + $0x50] sm:$0xff]
    %v720 = vld [vmem:[%s6 + $0x58] sm:$0xff]
    %v721 = vld [vmem:[%s6 + $0x60] sm:$0xff]
    %v722 = vld [vmem:[%s6 + $0x68] sm:$0xff]
    %v723 = vld [vmem:[%s6 + $0x70] sm:$0xff]
    %v724 = vld [vmem:[%s6 + $0x78] sm:$0xff]
    %726 = vset.pattern.permute.xlu0 0
    %727 = vperm.xlu0 %726, %v709
    %v728 = vpop.permute.xlu0 %727
    %731 = vset.pattern.permute.xlu0 0
    %732 = vperm.xlu0 %731, %v710
    %v733 = vpop.permute.xlu0 %732
    %736 = vset.pattern.permute.xlu0 0
    %737 = vperm.xlu0 %736, %v711
    %v738 = vpop.permute.xlu0 %737
    %741 = vset.pattern.permute.xlu0 0
    %742 = vperm.xlu0 %741, %v712
    %v743 = vpop.permute.xlu0 %742
    %746 = vset.pattern.permute.xlu0 0
    %747 = vperm.xlu0 %746, %v713
    %v748 = vpop.permute.xlu0 %747
    %751 = vset.pattern.permute.xlu0 0
    %752 = vperm.xlu0 %751, %v714
    %v753 = vpop.permute.xlu0 %752
    %756 = vset.pattern.permute.xlu0 0
    %757 = vperm.xlu0 %756, %v715
    %v758 = vpop.permute.xlu0 %757
    %761 = vset.pattern.permute.xlu0 0
    %762 = vperm.xlu0 %761, %v716
    %v763 = vpop.permute.xlu0 %762
    %766 = vset.pattern.permute.xlu0 0
    %767 = vperm.xlu0 %766, %v717
    %v768 = vpop.permute.xlu0 %767
    %771 = vset.pattern.permute.xlu0 0
    %772 = vperm.xlu0 %771, %v718
    %v773 = vpop.permute.xlu0 %772
    %776 = vset.pattern.permute.xlu0 0
    %777 = vperm.xlu0 %776, %v719
    %v778 = vpop.permute.xlu0 %777
    %781 = vset.pattern.permute.xlu0 0
    %782 = vperm.xlu0 %781, %v720
    %v783 = vpop.permute.xlu0 %782
    %786 = vset.pattern.permute.xlu0 0
    %787 = vperm.xlu0 %786, %v721
    %v788 = vpop.permute.xlu0 %787
    %791 = vset.pattern.permute.xlu0 0
    %792 = vperm.xlu0 %791, %v722
    %v793 = vpop.permute.xlu0 %792
    %796 = vset.pattern.permute.xlu0 0
    %797 = vperm.xlu0 %796, %v723
    %v798 = vpop.permute.xlu0 %797
    %801 = vset.pattern.permute.xlu0 0
    %802 = vperm.xlu0 %801, %v724
    %v803 = vpop.permute.xlu0 %802
    %v821 = vunpack.c.l.b16 %v693
    %v822 = vunpack.c.l.b16 %v694
    %v823 = vunpack.c.l.b16 %v695
    %v824 = vunpack.c.l.b16 %v696
    %v825 = vunpack.c.l.b16 %v697
    %v826 = vunpack.c.l.b16 %v698
    %v827 = vunpack.c.l.b16 %v699
    %v828 = vunpack.c.l.b16 %v700
    %v829 = vunpack.c.l.b16 %v701
    %v830 = vunpack.c.l.b16 %v702
    %v831 = vunpack.c.l.b16 %v703
    %v832 = vunpack.c.l.b16 %v704
    %v833 = vunpack.c.l.b16 %v705
    %v834 = vunpack.c.l.b16 %v706
    %v835 = vunpack.c.l.b16 %v707
    %v836 = vunpack.c.l.b16 %v708
    %v837 = vpack.c.b16 %v822, %v821
    %v838 = vpack.c.b16 %v824, %v823
    %v839 = vpack.c.b16 %v826, %v825
    %v840 = vpack.c.b16 %v828, %v827
    %v841 = vpack.c.b16 %v830, %v829
    %v842 = vpack.c.b16 %v832, %v831
    %v843 = vpack.c.b16 %v834, %v833
    %v844 = vpack.c.b16 %v836, %v835
    %853 = vmatprep.subr.bf16.mxu0 0
    %854 = vmatpush1.bf16.msra.mxu0 %v692
    %855 = vmatprep.subr.bf16.mxu0 0
    %856 = vmatpush1.bf16.msra.mxu0 %v691
    %857 = vmatprep.subr.bf16.mxu0 0
    %858 = vmatpush1.bf16.msra.mxu0 %v690
    %859 = vmatprep.subr.bf16.mxu0 0
    %860 = vmatpush1.bf16.msra.mxu0 %v689
    %861 = vmatprep.subr.bf16.mxu0 0
    %862 = vmatpush1.bf16.msra.mxu0 %v688
    %863 = vmatprep.subr.bf16.mxu0 0
    %864 = vmatpush1.bf16.msra.mxu0 %v687
    %865 = vmatprep.subr.bf16.mxu0 0
    %866 = vmatpush1.bf16.msra.mxu0 %v686
    %867 = vmatprep.subr.bf16.mxu0 0
    %868 = vmatpush1.bf16.msra.mxu0 %v685
    %869 = vmatprep.subr.bf16.mxu0 0
    %870 = vmatpush2.bf16.msra.mxu0 0
    %871 = vmatprep.subr.bf16.mxu0 0
    %872 = vmatpush2.bf16.msra.mxu0 0
    %873 = vmatprep.subr.bf16.mxu0 0
    %874 = vmatpush2.bf16.msra.mxu0 0
    %875 = vmatprep.subr.bf16.mxu0 0
    %876 = vmatpush2.bf16.msra.mxu0 0
    %877 = vmatprep.subr.bf16.mxu0 0
    %878 = vmatpush2.bf16.msra.mxu0 0
    %879 = vmatprep.subr.bf16.mxu0 0
    %880 = vmatpush2.bf16.msra.mxu0 0
    %881 = vmatprep.subr.bf16.mxu0 0
    %882 = vmatpush2.bf16.msra.mxu0 0
    %883 = vmatprep.subr.bf16.mxu0 0
    %884 = vmatpush2.bf16.msra.mxu0 0
    %885 = vmatprep.mubr.bf16.mxu0 0
    %886 = vmatmul.mubr.bf16.gmra.mxu0 %v837
    %v887 = vpop.f32.mrf.mxu0
    %v888 = vadd.f32 %v728, %v887
    %v889 = vpop.f32.mrf.mxu0
    %v890 = vpop.f32.mrf.mxu0
    %v891 = vadd.f32 %v733, %v890
    %v892 = vpop.f32.mrf.mxu0
    %893 = vmatprep.mubr.bf16.mxu0 0
    %894 = vmatmul.mubr.bf16.gmra.mxu0 %v838
    %v895 = vpop.f32.mrf.mxu0
    %v896 = vadd.f32 %v738, %v895
    %v897 = vpop.f32.mrf.mxu0
    %v898 = vpop.f32.mrf.mxu0
    %v899 = vadd.f32 %v743, %v898
    %v900 = vpop.f32.mrf.mxu0
    %901 = vmatprep.mubr.bf16.mxu0 0
    %902 = vmatmul.mubr.bf16.gmra.mxu0 %v839
    %v903 = vpop.f32.mrf.mxu0
    %v904 = vadd.f32 %v748, %v903
    %v905 = vpop.f32.mrf.mxu0
    %v906 = vpop.f32.mrf.mxu0
    %v907 = vadd.f32 %v753, %v906
    %v908 = vpop.f32.mrf.mxu0
    %909 = vmatprep.mubr.bf16.mxu0 0
    %910 = vmatmul.mubr.bf16.gmra.mxu0 %v840
    %v911 = vpop.f32.mrf.mxu0
    %v912 = vadd.f32 %v758, %v911
    %v913 = vpop.f32.mrf.mxu0
    %v914 = vpop.f32.mrf.mxu0
    %v915 = vadd.f32 %v763, %v914
    %v916 = vpop.f32.mrf.mxu0
    %917 = vmatprep.mubr.bf16.mxu0 0
    %918 = vmatmul.mubr.bf16.gmra.mxu0 %v841
    %v919 = vpop.f32.mrf.mxu0
    %v920 = vadd.f32 %v768, %v919
    %v921 = vpop.f32.mrf.mxu0
    %v922 = vpop.f32.mrf.mxu0
    %v923 = vadd.f32 %v773, %v922
    %v924 = vpop.f32.mrf.mxu0
    %925 = vmatprep.mubr.bf16.mxu0 0
    %926 = vmatmul.mubr.bf16.gmra.mxu0 %v842
    %v927 = vpop.f32.mrf.mxu0
    %v928 = vadd.f32 %v778, %v927
    %v929 = vpop.f32.mrf.mxu0
    %v930 = vpop.f32.mrf.mxu0
    %v931 = vadd.f32 %v783, %v930
    %v932 = vpop.f32.mrf.mxu0
    %933 = vmatprep.mubr.bf16.mxu0 0
    %934 = vmatmul.mubr.bf16.gmra.mxu0 %v843
    %v935 = vpop.f32.mrf.mxu0
    %v936 = vadd.f32 %v788, %v935
    %v937 = vpop.f32.mrf.mxu0
    %v938 = vpop.f32.mrf.mxu0
    %v939 = vadd.f32 %v793, %v938
    %v940 = vpop.f32.mrf.mxu0
    %941 = vmatprep.mubr.bf16.mxu0 0
    %942 = vmatmul.mubr.bf16.gmra.mxu0 %v844
    %v943 = vpop.f32.mrf.mxu0
    %v944 = vadd.f32 %v798, %v943
    %v945 = vpop.f32.mrf.mxu0
    %v946 = vpop.f32.mrf.mxu0
    %v947 = vadd.f32 %v803, %v946
    %v948 = vpop.f32.mrf.mxu0
    %949 = vdwg.mxu0
    %v950 = vmul.f32 %v888, 0.01
    %v951 = vmul.f32 %v891, 0.01
    %v952 = vmul.f32 %v896, 0.01
    %v953 = vmul.f32 %v899, 0.01
    %v954 = vmul.f32 %v904, 0.01
    %v955 = vmul.f32 %v907, 0.01
    %v956 = vmul.f32 %v912, 0.01
    %v957 = vmul.f32 %v915, 0.01
    %v958 = vmul.f32 %v920, 0.01
    %v959 = vmul.f32 %v923, 0.01
    %v960 = vmul.f32 %v928, 0.01
    %v961 = vmul.f32 %v931, 0.01
    %v962 = vmul.f32 %v936, 0.01
    %v963 = vmul.f32 %v939, 0.01
    %v964 = vmul.f32 %v944, 0.01
    %v965 = vmul.f32 %v947, 0.01
    %v966 = vmax.f32 %v888, %v950
    %v967 = vmax.f32 %v891, %v951
    %v968 = vmax.f32 %v896, %v952
    %v969 = vmax.f32 %v899, %v953
    %v970 = vmax.f32 %v904, %v954
    %v971 = vmax.f32 %v907, %v955
    %v972 = vmax.f32 %v912, %v956
    %v973 = vmax.f32 %v915, %v957
    %v974 = vmax.f32 %v920, %v958
    %v975 = vmax.f32 %v923, %v959
    %v976 = vmax.f32 %v928, %v960
    %v977 = vmax.f32 %v931, %v961
    %v978 = vmax.f32 %v936, %v962
    %v979 = vmax.f32 %v939, %v963
    %v980 = vmax.f32 %v944, %v964
    %v981 = vmax.f32 %v947, %v965
    %v982 = vpack.c.bf16 %v967, %v966
    %v983 = vpack.c.bf16 %v969, %v968
    %v984 = vpack.c.bf16 %v971, %v970
    %v985 = vpack.c.bf16 %v973, %v972
    %v986 = vpack.c.bf16 %v975, %v974
    %v987 = vpack.c.bf16 %v977, %v976
    %v988 = vpack.c.bf16 %v979, %v978
    %v989 = vpack.c.bf16 %v981, %v980
    %v990 = vld [vmem:[%s7] sm:$0xf]
    %v991 = vld [vmem:[%s7 + $0x4] sm:$0xf]
    %v992 = vld [vmem:[%s7 + $0x8] sm:$0xf]
    %v993 = vld [vmem:[%s7 + $0xc] sm:$0xf]
    %v994 = vld [vmem:[%s7 + $0x10] sm:$0xf]
    %v995 = vld [vmem:[%s7 + $0x14] sm:$0xf]
    %v996 = vld [vmem:[%s7 + $0x18] sm:$0xf]
    %v997 = vld [vmem:[%s7 + $0x1c] sm:$0xf]
    %v998 = vld [vmem:[%s8] sm:$0xff]
    %v999 = vld [vmem:[%s8 + $0x8] sm:$0xff]
    %v1000 = vld [vmem:[%s8 + $0x10] sm:$0xff]
    %v1001 = vld [vmem:[%s8 + $0x18] sm:$0xff]
    %v1002 = vld [vmem:[%s8 + $0x20] sm:$0xff]
    %v1003 = vld [vmem:[%s8 + $0x28] sm:$0xff]
    %v1004 = vld [vmem:[%s8 + $0x30] sm:$0xff]
    %v1005 = vld [vmem:[%s8 + $0x38] sm:$0xff]
    %1007 = vset.pattern.permute.xlu0 0
    %1008 = vperm.xlu0 %1007, %v998
    %v1009 = vpop.permute.xlu0 %1008
    %1012 = vset.pattern.permute.xlu0 0
    %1013 = vperm.xlu0 %1012, %v999
    %v1014 = vpop.permute.xlu0 %1013
    %1017 = vset.pattern.permute.xlu0 0
    %1018 = vperm.xlu0 %1017, %v1000
    %v1019 = vpop.permute.xlu0 %1018
    %1022 = vset.pattern.permute.xlu0 0
    %1023 = vperm.xlu0 %1022, %v1001
    %v1024 = vpop.permute.xlu0 %1023
    %1027 = vset.pattern.permute.xlu0 0
    %1028 = vperm.xlu0 %1027, %v1002
    %v1029 = vpop.permute.xlu0 %1028
    %1032 = vset.pattern.permute.xlu0 0
    %1033 = vperm.xlu0 %1032, %v1003
    %v1034 = vpop.permute.xlu0 %1033
    %1037 = vset.pattern.permute.xlu0 0
    %1038 = vperm.xlu0 %1037, %v1004
    %v1039 = vpop.permute.xlu0 %1038
    %1042 = vset.pattern.permute.xlu0 0
    %1043 = vperm.xlu0 %1042, %v1005
    %v1044 = vpop.permute.xlu0 %1043
    %v1054 = vunpack.c.l.b16 %v990
    %v1055 = vunpack.c.l.b16 %v991
    %v1056 = vunpack.c.l.b16 %v992
    %v1057 = vunpack.c.l.b16 %v993
    %v1058 = vunpack.c.l.b16 %v994
    %v1059 = vunpack.c.l.b16 %v995
    %v1060 = vunpack.c.l.b16 %v996
    %v1061 = vunpack.c.l.b16 %v997
    %v1062 = vpack.c.b16 %v1055, %v1054
    %v1063 = vpack.c.b16 %v1057, %v1056
    %v1064 = vpack.c.b16 %v1059, %v1058
    %v1065 = vpack.c.b16 %v1061, %v1060
    %1070 = vmatprep.subr.bf16.mxu0 0
    %1071 = vmatpush1.bf16.msra.mxu0 %v989
    %1072 = vmatprep.subr.bf16.mxu0 0
    %1073 = vmatpush1.bf16.msra.mxu0 %v988
    %1074 = vmatprep.subr.bf16.mxu0 0
    %1075 = vmatpush1.bf16.msra.mxu0 %v987
    %1076 = vmatprep.subr.bf16.mxu0 0
    %1077 = vmatpush1.bf16.msra.mxu0 %v986
    %1078 = vmatprep.subr.bf16.mxu0 0
    %1079 = vmatpush1.bf16.msra.mxu0 %v985
    %1080 = vmatprep.subr.bf16.mxu0 0
    %1081 = vmatpush1.bf16.msra.mxu0 %v984
    %1082 = vmatprep.subr.bf16.mxu0 0
    %1083 = vmatpush1.bf16.msra.mxu0 %v983
    %1084 = vmatprep.subr.bf16.mxu0 0
    %1085 = vmatpush1.bf16.msra.mxu0 %v982
    %1086 = vmatprep.subr.bf16.mxu0 0
    %1087 = vmatpush2.bf16.msra.mxu0 0
    %1088 = vmatprep.subr.bf16.mxu0 0
    %1089 = vmatpush2.bf16.msra.mxu0 0
    %1090 = vmatprep.subr.bf16.mxu0 0
    %1091 = vmatpush2.bf16.msra.mxu0 0
    %1092 = vmatprep.subr.bf16.mxu0 0
    %1093 = vmatpush2.bf16.msra.mxu0 0
    %1094 = vmatprep.subr.bf16.mxu0 0
    %1095 = vmatpush2.bf16.msra.mxu0 0
    %1096 = vmatprep.subr.bf16.mxu0 0
    %1097 = vmatpush2.bf16.msra.mxu0 0
    %1098 = vmatprep.subr.bf16.mxu0 0
    %1099 = vmatpush2.bf16.msra.mxu0 0
    %1100 = vmatprep.subr.bf16.mxu0 0
    %1101 = vmatpush2.bf16.msra.mxu0 0
    %1102 = vmatprep.mubr.bf16.mxu0 0
    %1103 = vmatmul.mubr.bf16.gmra.mxu0 %v1062
    %v1104 = vpop.f32.mrf.mxu0
    %v1105 = vadd.f32 %v1009, %v1104
    %v1106 = vpop.f32.mrf.mxu0
    %v1107 = vpop.f32.mrf.mxu0
    %v1108 = vadd.f32 %v1014, %v1107
    %v1109 = vpop.f32.mrf.mxu0
    %1110 = vmatprep.mubr.bf16.mxu0 0
    %1111 = vmatmul.mubr.bf16.gmra.mxu0 %v1063
    %v1112 = vpop.f32.mrf.mxu0
    %v1113 = vadd.f32 %v1019, %v1112
    %v1114 = vpop.f32.mrf.mxu0
    %v1115 = vpop.f32.mrf.mxu0
    %v1116 = vadd.f32 %v1024, %v1115
    %v1117 = vpop.f32.mrf.mxu0
    %1118 = vmatprep.mubr.bf16.mxu0 0
    %1119 = vmatmul.mubr.bf16.gmra.mxu0 %v1064
    %v1120 = vpop.f32.mrf.mxu0
    %v1121 = vadd.f32 %v1029, %v1120
    %v1122 = vpop.f32.mrf.mxu0
    %v1123 = vpop.f32.mrf.mxu0
    %v1124 = vadd.f32 %v1034, %v1123
    %v1125 = vpop.f32.mrf.mxu0
    %1126 = vmatprep.mubr.bf16.mxu0 0
    %1127 = vmatmul.mubr.bf16.gmra.mxu0 %v1065
    %v1128 = vpop.f32.mrf.mxu0
    %v1129 = vadd.f32 %v1039, %v1128
    %v1130 = vpop.f32.mrf.mxu0
    %v1131 = vpop.f32.mrf.mxu0
    %v1132 = vadd.f32 %v1044, %v1131
    %v1133 = vpop.f32.mrf.mxu0
    %1134 = vdwg.mxu0
    %v1135 = vmul.f32 %v1105, 0.01
    %v1136 = vmul.f32 %v1108, 0.01
    %v1137 = vmul.f32 %v1113, 0.01
    %v1138 = vmul.f32 %v1116, 0.01
    %v1139 = vmul.f32 %v1121, 0.01
    %v1140 = vmul.f32 %v1124, 0.01
    %v1141 = vmul.f32 %v1129, 0.01
    %v1142 = vmul.f32 %v1132, 0.01
    %v1143 = vmax.f32 %v1105, %v1135
    %v1144 = vmax.f32 %v1108, %v1136
    %v1145 = vmax.f32 %v1113, %v1137
    %v1146 = vmax.f32 %v1116, %v1138
    %v1147 = vmax.f32 %v1121, %v1139
    %v1148 = vmax.f32 %v1124, %v1140
    %v1149 = vmax.f32 %v1129, %v1141
    %v1150 = vmax.f32 %v1132, %v1142
    %v1151 = vpack.c.bf16 %v1144, %v1143
    %v1152 = vpack.c.bf16 %v1146, %v1145
    %v1153 = vpack.c.bf16 %v1148, %v1147
    %v1154 = vpack.c.bf16 %v1150, %v1149
    %v1155 = vld [vmem:[%s9] sm:$0xff]
    %v1156 = vld [vmem:[%s9 + $0x8] sm:$0xff]
    %v1157 = vld [vmem:[%s9 + $0x10] sm:$0xff]
    %v1158 = vld [vmem:[%s9 + $0x18] sm:$0xff]
    %v1159 = vld [vmem:[%s9 + $0x20] sm:$0xff]
    %v1160 = vld [vmem:[%s9 + $0x28] sm:$0xff]
    %v1161 = vld [vmem:[%s9 + $0x30] sm:$0xff]
    %v1162 = vld [vmem:[%s9 + $0x38] sm:$0xff]
    %v1163 = vunpack.c.l.bf16 %v1151
    %v1164 = vunpack.c.h.bf16 %v1151
    %v1165 = vunpack.c.l.bf16 %v1152
    %v1166 = vunpack.c.h.bf16 %v1152
    %v1167 = vunpack.c.l.bf16 %v1153
    %v1168 = vunpack.c.h.bf16 %v1153
    %v1169 = vunpack.c.l.bf16 %v1154
    %v1170 = vunpack.c.h.bf16 %v1154
    %1172 = vset.pattern.permute.xlu0 0
    %1173 = vperm.xlu0 %1172, %v1155
    %v1174 = vpop.permute.xlu0 %1173
    %1177 = vset.pattern.permute.xlu0 0
    %1178 = vperm.xlu0 %1177, %v1156
    %v1179 = vpop.permute.xlu0 %1178
    %1182 = vset.pattern.permute.xlu0 0
    %1183 = vperm.xlu0 %1182, %v1157
    %v1184 = vpop.permute.xlu0 %1183
    %1187 = vset.pattern.permute.xlu0 0
    %1188 = vperm.xlu0 %1187, %v1158
    %v1189 = vpop.permute.xlu0 %1188
    %1192 = vset.pattern.permute.xlu0 0
    %1193 = vperm.xlu0 %1192, %v1159
    %v1194 = vpop.permute.xlu0 %1193
    %1197 = vset.pattern.permute.xlu0 0
    %1198 = vperm.xlu0 %1197, %v1160
    %v1199 = vpop.permute.xlu0 %1198
    %1202 = vset.pattern.permute.xlu0 0
    %1203 = vperm.xlu0 %1202, %v1161
    %v1204 = vpop.permute.xlu0 %1203
    %1207 = vset.pattern.permute.xlu0 0
    %1208 = vperm.xlu0 %1207, %v1162
    %v1209 = vpop.permute.xlu0 %1208
    %v1211 = vmul.f32 %v1174, %v1163
    %v1212 = vmul.f32 %v1179, %v1164
    %v1213 = vmul.f32 %v1184, %v1165
    %v1214 = vmul.f32 %v1189, %v1166
    %v1215 = vmul.f32 %v1194, %v1167
    %v1216 = vmul.f32 %v1199, %v1168
    %v1217 = vmul.f32 %v1204, %v1169
    %v1218 = vmul.f32 %v1209, %v1170
    %vm1219 = vcmask 130048
    %v1220 = vsel %vm1219, %v1211, 0.0
    %v1221 = vsel %vm1219, %v1212, 0.0
    %v1222 = vadd.f32 %v1220, %v1221
    %v1223 = vsel %vm1219, %v1213, 0.0
    %v1224 = vadd.f32 %v1222, %v1223
    %v1225 = vsel %vm1219, %v1214, 0.0
    %v1226 = vadd.f32 %v1224, %v1225
    %v1227 = vsel %vm1219, %v1215, 0.0
    %v1228 = vadd.f32 %v1226, %v1227
    %v1229 = vsel %vm1219, %v1216, 0.0
    %v1230 = vadd.f32 %v1228, %v1229
    %v1231 = vsel %vm1219, %v1217, 0.0
    %v1232 = vadd.f32 %v1230, %v1231
    %v1233 = vsel %vm1219, %v1218, 0.0
    %v1234 = vadd.f32 %v1232, %v1233
    %v1235 = vrot.slane %v1234, 4
    %v1236 = vadd.f32 %v1234, %v1235
    %v1237 = vrot.slane %v1236, 2
    %v1238 = vadd.f32 %v1236, %v1237
    %v1239 = vrot.slane %v1238, 1
    %v1240 = vadd.f32 %v1238, %v1239
    %v1241 = vld [vmem:[#allocation2] sm:$0x1]
    %1243 = vset.pattern.permute.xlu0 0
    %1244 = vperm.xlu0 %1243, %v1241
    %v1245 = vpop.permute.xlu0 %1244
    %v1247 = vlaneseq
    %v1248 = vshrl.u32 %v1247, 7
    %v1249 = vsub.s32 0, %v1248
    %v1250 = vrot.slane %v1245, %v1249
    %v1251 = vadd.f32 %v1240, %v1250
    %vm1252 = vcmask 122880
    %1253 = vst.msk [vmem:[#allocation3] sm:$0x1] %vm1252, %v1251
    // Predicated region
    $region46: #{tpu_custom_call.1} parent=1 // pred_check
      _
    $region47: #{tpu_custom_call.1} parent=1 // pred_check_branch
      %1255 = sbr.rel (0) target = $region49
    $region48: #{tpu_custom_call.1} parent=1 // pred_region
      %s1257 = ssub.s32 16, 16
      %1258 = vsyncadd [#allocation4], %s1257
      %s1260 = sshll.u32 [#allocation3], 4
      %s1261 = int_to_ptr.vmem [resolvable:$true] %s1260
      %1263 = dma.vmem_to_hbm [thread:$0]  %s1261, 16, %s11, [#allocation4]
    $region49: #{tpu_custom_call.1} parent=1 // pred_fallthru
      _
    // Predicated region
    $region50: #{tpu_custom_call.1} parent=1 // pred_check
      _
    $region51: #{tpu_custom_call.1} parent=1 // pred_check_branch
      %1265 = sbr.rel (0) target = $region53
    $region52: #{tpu_custom_call.1} parent=1 // pred_region
      %1266 = dma.done [#allocation4], 16
    $region53: #{tpu_custom_call.1} parent=1 // pred_fallthru
      _
    %1267 = vsyncpa [#allocation4], 1

</llo_original>
